<compile_context>
chip_gen: v7x
topology: tpu7x:2x2x1
jax: 0.10.0
libtpu: 0.0.40
codegen_flags: <defaults>
</compile_context>

<pallas_src>
import jax
import jax.numpy as jnp
from jax.experimental import pallas as pl
from jax.experimental.pallas import tpu as pltpu


def _round_up(a, b):
    return ((a + b - 1) // b) * b


def _mh_weighted_kernel(bd_ref, x_ref, y_ref, w_ref, o_ref):
    bd = bd_ref[0]                                  # SMEM scalar (no recompile per value)
    x = x_ref[...].astype(jnp.float32)
    y = y_ref[...].astype(jnp.float32)
    w = w_ref[...].astype(jnp.float32)
    r = jnp.abs(x - y)
    delta = w * bd
    low = 0.5 * r * r
    high = delta * (r - 0.5 * delta)
    o_ref[...] = jnp.where(r < delta, low, high).astype(o_ref.dtype)


def _mh_unweighted_kernel(bd_ref, x_ref, y_ref, o_ref):
    # weights == ones  =>  delta is a scalar; no weight stream needed (~25% less HBM traffic).
    bd = bd_ref[0]
    x = x_ref[...].astype(jnp.float32)
    y = y_ref[...].astype(jnp.float32)
    r = jnp.abs(x - y)
    low = 0.5 * r * r
    high = bd * (r - 0.5 * bd)
    o_ref[...] = jnp.where(r < bd, low, high).astype(o_ref.dtype)


def modified_huber(x, y, weights=None, *, base_delta=1.0):
    """Elementwise modified-Huber loss. Returns an array shaped like x."""
    x = jnp.asarray(x)
    y = jnp.asarray(y)

    orig_shape = x.shape
    in_dtype = x.dtype
    # Float outputs always (integer inputs would otherwise be truncated).
    out_dtype = in_dtype if jnp.issubdtype(in_dtype, jnp.floating) else jnp.float32
    n = x.size
    if n == 0:
        return jnp.zeros(orig_shape, out_dtype)

    lanes = 128
    itemsize = max(1, jnp.dtype(in_dtype).itemsize)
    sub = 8 * max(1, 4 // itemsize)                 # sublane quantum per dtype

    # Minimal padding: only to the 128-lane quantum, and only if truly ragged.
    rem = n % lanes
    padded_n = n if rem == 0 else n + (lanes - rem)
    rows = padded_n // lanes

    def _prep(a):
        a = jnp.asarray(a).reshape(-1)
        if padded_n != n:
            a = jnp.pad(a, (0, padded_n - n))       # at most 127 elements of pad
        return a.reshape(rows, lanes)               # bitcast-cheap in the aligned case

    # Tile sizing: ~2 MiB per stream (byte parity across dtypes).
    budget_bytes = 2 * 1024 * 1024
    max_block_rows = max(sub, (budget_bytes // (lanes * itemsize)) // sub * sub)
    num_blocks = pl.cdiv(rows, max_block_rows)
    # With >=512 KiB of work, force an even grid so the "parallel" axis splits
    # cleanly across v7x's two TensorCores (harmless on v5e/v6e).
    if rows * lanes * itemsize >= (512 * 1024):
        num_blocks = max(2, num_blocks)
        num_blocks += num_blocks % 2
    block_rows = min(max_block_rows, _round_up(pl.cdiv(rows, num_blocks), sub))
    grid = (pl.cdiv(rows, block_rows),)             # last block may overhang -> masked

    spec = pl.BlockSpec((block_rows, lanes), lambda i, bd: (i, 0))
    bd_arr = jnp.asarray([base_delta], dtype=jnp.float32)

    if weights is not None:
        kernel = _mh_weighted_kernel
        operands = (bd_arr, _prep(x), _prep(y), _prep(weights))
        in_specs = [spec, spec, spec]
        in_bytes = 3 * padded_n * itemsize
    else:
        kernel = _mh_unweighted_kernel
        operands = (bd_arr, _prep(x), _prep(y))
        in_specs = [spec, spec]
        in_bytes = 2 * padded_n * itemsize

    cost = pl.CostEstimate(
        flops=8 * padded_n,
        transcendentals=0,
        bytes_accessed=in_bytes + padded_n * jnp.dtype(out_dtype).itemsize,
    )

    out = pl.pallas_call(
        kernel,
        out_shape=jax.ShapeDtypeStruct((rows, lanes), out_dtype),
        grid_spec=pltpu.PrefetchScalarGridSpec(
            num_scalar_prefetch=1,                  # base_delta -> SMEM scalar
            grid=grid,
            in_specs=in_specs,
            out_specs=spec,
        ),
        compiler_params=pltpu.CompilerParams(
            dimension_semantics=("parallel",),
            vmem_limit_bytes=32 * 1024 * 1024,      # fits every generation's physical VMEM
        ),
        cost_estimate=cost,
    )(*operands)

    flat = out.reshape(-1)
    if padded_n != n:
        flat = flat[:n]
    return flat.reshape(orig_shape)


def _reference(x, y, weights, base_delta):
    # Pure-JAX reference mirroring the PyTorch forward.
    if weights is None:
        weights = jnp.ones_like(x)
    r = jnp.abs(x - y)
    delta = weights * base_delta
    return jnp.where(r < delta, 0.5 * r * r, delta * (r - 0.5 * delta))


if __name__ == "__main__":
    key = jax.random.PRNGKey(0)
    kx, ky, kw = jax.random.split(key, 3)

    base_delta = 0.75  # deterministic "parameter" from the module __init__

    # Case 1: small NCHW input with explicit weights (aligned, grid=1).
    shape = (2, 4, 16, 16)
    x = jax.random.normal(kx, shape, dtype=jnp.float32)
    y = jax.random.normal(ky, shape, dtype=jnp.float32)
    w = jax.random.uniform(kw, shape, dtype=jnp.float32, minval=0.5, maxval=1.5)

    out = jax.block_until_ready(modified_huber(x, y, w, base_delta=base_delta))
    ref = _reference(x, y, w, base_delta)
    assert out.shape == x.shape and out.dtype == x.dtype
    assert jnp.allclose(out, ref, atol=1e-6, rtol=1e-6)

    # Case 1b: different base_delta reuses the same compiled kernel (SMEM scalar).
    out_b = jax.block_until_ready(modified_huber(x, y, w, base_delta=1.3))
    assert jnp.allclose(out_b, _reference(x, y, w, 1.3), atol=1e-6, rtol=1e-6)

    # Case 2: weights=None -> dedicated 2-input kernel (no ones array streamed).
    out2 = jax.block_until_ready(modified_huber(x, y, None, base_delta=base_delta))
    ref2 = _reference(x, y, None, base_delta)
    assert jnp.allclose(out2, ref2, atol=1e-6, rtol=1e-6)

    # Case 3: ragged size (n % 128 != 0) exercising the minimal 128-lane pad path.
    shape3 = (3, 5, 17, 19)
    x3 = jax.random.normal(kx, shape3, dtype=jnp.float32)
    y3 = jax.random.normal(ky, shape3, dtype=jnp.float32)
    w3 = jax.random.uniform(kw, shape3, dtype=jnp.float32, minval=0.5, maxval=1.5)
    out3 = jax.block_until_ready(modified_huber(x3, y3, w3, base_delta=base_delta))
    ref3 = _reference(x3, y3, w3, base_delta)
    assert out3.shape == shape3
    assert jnp.allclose(out3, ref3, atol=1e-6, rtol=1e-6)

    # Case 4: larger aligned input -> even grid of 2 blocks (megacore split).
    shape4 = (8, 16, 64, 64)  # 524288 elems = 4096 rows of 128
    x4 = jax.random.normal(kx, shape4, dtype=jnp.float32)
    y4 = jax.random.normal(ky, shape4, dtype=jnp.float32)
    out4 = jax.block_until_ready(modified_huber(x4, y4, None, base_delta=base_delta))
    ref4 = _reference(x4, y4, None, base_delta)
    assert jnp.allclose(out4, ref4, atol=1e-6, rtol=1e-6)

    # Case 4b: lane-aligned but not block-aligned -> grid=2 with a masked
    # overhanging last block, and NO pad/slice copies on the host side.
    shape4b = (1100, 128)
    x4b = jax.random.normal(kx, shape4b, dtype=jnp.float32)
    y4b = jax.random.normal(ky, shape4b, dtype=jnp.float32)
    w4b = jax.random.uniform(kw, shape4b, dtype=jnp.float32, minval=0.5, maxval=1.5)
    out4b = jax.block_until_ready(modified_huber(x4b, y4b, w4b, base_delta=base_delta))
    ref4b = _reference(x4b, y4b, w4b, base_delta)
    assert jnp.allclose(out4b, ref4b, atol=1e-6, rtol=1e-6)

    # Case 5: bf16 end-to-end (native dtype streamed; f32 compute in-register).
    xb = x.astype(jnp.bfloat16)
    yb = y.astype(jnp.bfloat16)
    wb = w.astype(jnp.bfloat16)
    outb = jax.block_until_ready(modified_huber(xb, yb, wb, base_delta=base_delta))
    refb = _reference(xb.astype(jnp.float32), yb.astype(jnp.float32),
                      wb.astype(jnp.float32), base_delta).astype(jnp.bfloat16)
    assert outb.dtype == jnp.bfloat16
    assert jnp.allclose(outb.astype(jnp.float32), refb.astype(jnp.float32),
                        atol=2e-2, rtol=2e-2)

    print("KERNEL_OK")
</pallas_src>

<mosaic_0001>
module attributes {stable_mosaic.version = 11 : i64} {
  func.func @_mh_weighted_kernel(%arg0: i32, %arg1: memref<1xf32, #tpu.memory_space<smem>>, %arg2: memref<16x128xf32, #tpu.memory_space<vmem>>, %arg3: memref<16x128xf32, #tpu.memory_space<vmem>>, %arg4: memref<16x128xf32, #tpu.memory_space<vmem>>, %arg5: memref<16x128xf32, #tpu.memory_space<vmem>>) attributes {dimension_semantics = [#tpu.dimension_semantics<parallel>], iteration_bounds = array<i64: 1>, scalar_prefetch = 1 : i64, scratch_operands = 0 : i64, tpu.core_type = #tpu.core_type<tc>, window_params = [{transform_indices = @transform_0, window_bounds = array<i64: 16, 128>}, {transform_indices = @transform_1, window_bounds = array<i64: 16, 128>}, {transform_indices = @transform_2, window_bounds = array<i64: 16, 128>}, {transform_indices = @transform_3, window_bounds = array<i64: 16, 128>}]} {
    %c0 = arith.constant 0 : index
    %0 = memref.load %arg1[%c0] : memref<1xf32, #tpu.memory_space<smem>>
    %c0_0 = arith.constant 0 : index
    %c0_1 = arith.constant 0 : index
    %1 = vector.load %arg2[%c0_0, %c0_1] : memref<16x128xf32, #tpu.memory_space<vmem>>, vector<16x128xf32>
    %c0_2 = arith.constant 0 : index
    %c0_3 = arith.constant 0 : index
    %2 = vector.load %arg3[%c0_2, %c0_3] : memref<16x128xf32, #tpu.memory_space<vmem>>, vector<16x128xf32>
    %c0_4 = arith.constant 0 : index
    %c0_5 = arith.constant 0 : index
    %3 = vector.load %arg4[%c0_4, %c0_5] : memref<16x128xf32, #tpu.memory_space<vmem>>, vector<16x128xf32>
    %4 = arith.subf %1, %2 : vector<16x128xf32>
    %5 = math.absf %4 : vector<16x128xf32>
    %6 = vector.broadcast %0 : f32 to vector<16x128xf32>
    %7 = arith.mulf %3, %6 : vector<16x128xf32>
    %cst = arith.constant 5.000000e-01 : f32
    %8 = vector.broadcast %cst : f32 to vector<16x128xf32>
    %9 = arith.mulf %8, %5 : vector<16x128xf32>
    %10 = arith.mulf %9, %5 : vector<16x128xf32>
    %cst_6 = arith.constant 5.000000e-01 : f32
    %11 = vector.broadcast %cst_6 : f32 to vector<16x128xf32>
    %12 = arith.mulf %11, %7 : vector<16x128xf32>
    %13 = arith.subf %5, %12 : vector<16x128xf32>
    %14 = arith.mulf %7, %13 : vector<16x128xf32>
    %15 = arith.cmpf olt, %5, %7 : vector<16x128xf32>
    %16 = arith.select %15, %10, %14 : vector<16x128xi1>, vector<16x128xf32>
    %c0_7 = arith.constant 0 : index
    %c0_8 = arith.constant 0 : index
    %17 = vector.load %arg5[%c0_7, %c0_8] : memref<16x128xf32, #tpu.memory_space<vmem>>, vector<16x128xf32>
    tpu.vector_store %arg5[%c0_7, %c0_8], %16 {strides = array<i32>} : memref<16x128xf32, #tpu.memory_space<vmem>>, vector<16x128xf32>,
    return
  }
  func.func @transform_0(%arg0: i32, %arg1: memref<1xf32, #tpu.memory_space<smem>>) -> (i32, i32) {
    %c0_i32 = arith.constant 0 : i32
    %c0_i32_0 = arith.constant 0 : i32
    return %arg0, %c0_i32 : i32, i32
  }
  func.func @transform_1(%arg0: i32, %arg1: memref<1xf32, #tpu.memory_space<smem>>) -> (i32, i32) {
    %c0_i32 = arith.constant 0 : i32
    %c0_i32_0 = arith.constant 0 : i32
    return %arg0, %c0_i32 : i32, i32
  }
  func.func @transform_2(%arg0: i32, %arg1: memref<1xf32, #tpu.memory_space<smem>>) -> (i32, i32) {
    %c0_i32 = arith.constant 0 : i32
    %c0_i32_0 = arith.constant 0 : i32
    return %arg0, %c0_i32 : i32, i32
  }
  func.func @transform_3(%arg0: i32, %arg1: memref<1xf32, #tpu.memory_space<smem>>) -> (i32, i32) {
    %c0_i32 = arith.constant 0 : i32
    %c0_i32_0 = arith.constant 0 : i32
    return %arg0, %c0_i32 : i32, i32
  }
}

</mosaic_0001>

<llo_original>
// kernel: tpu_custom_call.1
$region0: #{tpu_custom_call.1}
  #allocation0 [shape = 'u32[]', space=smem, size = 0x4, offset = 0x4, fixed_abs, tag = 'smem constant byte address 0x4 - core index']
  #allocation1 [shape = 'u32[144,128]{1,0:T(1,128)}', space=vmem, size = 0x12000, scoped, tag = 'internal scratch']
  #allocation2 [shape = 's32[1]{0}', space=sflag, size = 0x4, scoped, tag = 'scoped memory for tpu_custom_call.1']
  #allocation3 [shape = 'f32[1]{0:T(128)S(6)}', space=smem, size = 0x200, scoped, tag = 'prefetched SMEM operand 0']
  %s0 = inlined_call_operand.<no memory space> [shape: f32[1], index: 0, kind: input, shape index: {}]
  %s1 = inlined_call_operand.hbm [shape: f32[16,128], index: 1, kind: input, shape index: {}]
  %s2 = inlined_call_operand.hbm [shape: f32[16,128], index: 2, kind: input, shape index: {}]
  %s3 = inlined_call_operand.hbm [shape: f32[16,128], index: 3, kind: input, shape index: {}]
  %s4 = inlined_call_operand.hbm [shape: f32[16,128], index: 4, kind: output, shape index: {}]
  %s5 = sld [smem:[#allocation0]]
  $region34: #{tpu_custom_call.1} parent=0
    _
  %s7 = ssub.s32 1, %s5
  %s8 = scalar_select 0, %s7, %s5
  %9 = sst [smem:[#allocation3]] %s0
  $region1: #{tpu_custom_call.1} parent=0
    #allocation4 [shape = 'u8[8192]{0}', space=vmem, size = 0x2000, scoped, tag = 'input window, operand 1, single buffered']
    #allocation5 [shape = 's32[1]{0}', space=sflag, size = 0x4, scoped, tag = 'scoped memory for tpu_custom_call.1']
    #allocation6 [shape = 's32[1]{0}', space=sflag, size = 0x4, scoped, tag = 'scoped memory for tpu_custom_call.1']
    #allocation7 [shape = 'u8[8192]{0}', space=vmem, size = 0x2000, scoped, tag = 'input window, operand 2, single buffered']
    #allocation8 [shape = 's32[1]{0}', space=sflag, size = 0x4, scoped, tag = 'scoped memory for tpu_custom_call.1']
    #allocation9 [shape = 'u8[8192]{0}', space=vmem, size = 0x2000, scoped, tag = 'input window, operand 3, single buffered']
    #allocation10 [shape = 'u8[8192]{0}', space=vmem, size = 0x2000, scoped, tag = 'output window, operand 0, single buffered']
    %10 = vsyncpa [#allocation5], 0
    %11 = vsyncpa [#allocation8], 0
    %12 = vsyncpa [#allocation6], 0
    // Predicated region
    $region2: #{tpu_custom_call.1} parent=1 // pred_check
      _
    $region3: #{tpu_custom_call.1} parent=1 // pred_check_branch
      %14 = sbr.rel (0) target = $region5
    $region4: #{tpu_custom_call.1} parent=1 // pred_region
      %s16 = ssub.s32 256, 256
      %17 = vsyncadd [#allocation5], %s16
      %s18 = sshll.u32 [#allocation4], 4
      %s19 = int_to_ptr.vmem [resolvable:$true] %s18
      %24 = dma.hbm_to_vmem [thread:$0]  %s1, 256, %s19, [#allocation5], 128, 128, 8
    $region5: #{tpu_custom_call.1} parent=1 // pred_fallthru
      _
    // Predicated region
    $region6: #{tpu_custom_call.1} parent=1 // pred_check
      _
    $region7: #{tpu_custom_call.1} parent=1 // pred_check_branch
      %26 = sbr.rel (0) target = $region9
    $region8: #{tpu_custom_call.1} parent=1 // pred_region
      %s28 = ssub.s32 256, 256
      %29 = vsyncadd [#allocation8], %s28
      %s30 = sshll.u32 [#allocation7], 4
      %s31 = int_to_ptr.vmem [resolvable:$true] %s30
      %36 = dma.hbm_to_vmem [thread:$0]  %s2, 256, %s31, [#allocation8], 128, 128, 8
    $region9: #{tpu_custom_call.1} parent=1 // pred_fallthru
      _
    // Predicated region
    $region10: #{tpu_custom_call.1} parent=1 // pred_check
      _
    $region11: #{tpu_custom_call.1} parent=1 // pred_check_branch
      %38 = sbr.rel (0) target = $region13
    $region12: #{tpu_custom_call.1} parent=1 // pred_region
      %s40 = ssub.s32 256, 256
      %41 = vsyncadd [#allocation8], %s40
      %s42 = sshll.u32 [#allocation9], 4
      %s43 = int_to_ptr.vmem [resolvable:$true] %s42
      %48 = dma.hbm_to_vmem [thread:$0]  %s3, 256, %s43, [#allocation8], 128, 128, 8
    $region13: #{tpu_custom_call.1} parent=1 // pred_fallthru
      _
    // Predicated region
    $region14: #{tpu_custom_call.1} parent=1 // pred_check
      _
    $region15: #{tpu_custom_call.1} parent=1 // pred_check_branch
      %50 = sbr.rel (0) target = $region17
    $region16: #{tpu_custom_call.1} parent=1 // pred_region
      %51 = dma.done [#allocation5], 256
    $region17: #{tpu_custom_call.1} parent=1 // pred_fallthru
      _
    // Predicated region
    $region18: #{tpu_custom_call.1} parent=1 // pred_check
      _
    $region19: #{tpu_custom_call.1} parent=1 // pred_check_branch
      %53 = sbr.rel (0) target = $region21
    $region20: #{tpu_custom_call.1} parent=1 // pred_region
      %54 = dma.done [#allocation8], 256
    $region21: #{tpu_custom_call.1} parent=1 // pred_fallthru
      _
    // Predicated region
    $region22: #{tpu_custom_call.1} parent=1 // pred_check
      _
    $region23: #{tpu_custom_call.1} parent=1 // pred_check_branch
      %56 = sbr.rel (0) target = $region25
    $region24: #{tpu_custom_call.1} parent=1 // pred_region
      %57 = dma.done [#allocation8], 256
    $region25: #{tpu_custom_call.1} parent=1 // pred_fallthru
      _
    %s58 = sld [smem:[#allocation3]]
    %v59 = vld [vmem:[#allocation4] sm:$0xff]
    %v60 = vld [vmem:[#allocation4 + $0x8] sm:$0xff]
    %v61 = vld [vmem:[#allocation7] sm:$0xff]
    %v62 = vld [vmem:[#allocation7 + $0x8] sm:$0xff]
    %v63 = vld [vmem:[#allocation9] sm:$0xff]
    %v64 = vld [vmem:[#allocation9 + $0x8] sm:$0xff]
    %v65 = vsub.f32 %v59, %v61
    %v66 = vsub.f32 %v60, %v62
    %v67 = vand.u32 2147483647, %v65
    %v68 = vand.u32 2147483647, %v66
    %v69 = vstv %s58
    %v70 = vmul.f32 %v63, %v69
    %v71 = vmul.f32 %v64, %v69
    %v72 = vmul.f32 %v67, 0.5
    %v73 = vmul.f32 %v68, 0.5
    %v74 = vmul.f32 %v72, %v67
    %v75 = vmul.f32 %v73, %v68
    %v76 = vmul.f32 %v70, 0.5
    %v77 = vmul.f32 %v71, 0.5
    %v78 = vsub.f32 %v67, %v76
    %v79 = vsub.f32 %v68, %v77
    %v80 = vmul.f32 %v70, %v78
    %v81 = vmul.f32 %v71, %v79
    %vm82 = vcmp.lt.f32.partialorder %v67, %v70
    %vm83 = vcmp.lt.f32.partialorder %v68, %v71
    %v84 = vsel %vm82, %v74, %v80
    %v85 = vsel %vm83, %v75, %v81
    %86 = vst [vmem:[#allocation10] sm:$0xff] %v84
    %87 = vst [vmem:[#allocation10 + $0x8] sm:$0xff] %v85
    // Predicated region
    $region26: #{tpu_custom_call.1} parent=1 // pred_check
      _
    $region27: #{tpu_custom_call.1} parent=1 // pred_check_branch
      %89 = sbr.rel (0) target = $region29
    $region28: #{tpu_custom_call.1} parent=1 // pred_region
      %s91 = ssub.s32 256, 256
      %92 = vsyncadd [#allocation6], %s91
      %s93 = sshll.u32 [#allocation10], 4
      %s94 = int_to_ptr.vmem [resolvable:$true] %s93
      %99 = dma.vmem_to_hbm [thread:$0]  %s94, 256, %s4, [#allocation6], 128, 128, 8
    $region29: #{tpu_custom_call.1} parent=1 // pred_fallthru
      _
    // Predicated region
    $region30: #{tpu_custom_call.1} parent=1 // pred_check
      _
    $region31: #{tpu_custom_call.1} parent=1 // pred_check_branch
      %101 = sbr.rel (0) target = $region33
    $region32: #{tpu_custom_call.1} parent=1 // pred_region
      %102 = dma.done [#allocation6], 256
    $region33: #{tpu_custom_call.1} parent=1 // pred_fallthru
      _
    %103 = vsyncpa [#allocation5], 1
    %104 = vsyncpa [#allocation8], 1
    %105 = vsyncpa [#allocation6], 1

</llo_original>
